<compile_context>
chip_gen: v7x
topology: tpu7x:2x2x1
jax: 0.10.0
libtpu: 0.0.40
codegen_flags: <defaults>
</compile_context>

<pallas_src>
import functools

import jax
import jax.numpy as jnp
from jax.experimental import pallas as pl
from jax.experimental.pallas import tpu as pltpu


def _round_up(n, m):
    return ((n + m - 1) // m) * m


def _pick_time_chunk(t_total, cap=32):
    """Largest divisor of t_total that is <= cap (so the grid splits evenly)."""
    tc = min(t_total, cap)
    while t_total % tc:
        tc -= 1
    return tc


# -----------------------------------------------------------------------------
# Kernel 1: input projection (time-independent, hoisted off the serial path)
#   gates_x[t, b, :] = x[t, b, :] @ W_ih^T + (b_ih + b_hh)
# -----------------------------------------------------------------------------
def _input_proj_kernel(x_ref, wih_t_ref, b_ref, gx_ref):
    tc, bp, i_dim = x_ref.shape
    x2 = x_ref[...].reshape(tc * bp, i_dim)
    gx = jnp.dot(x2, wih_t_ref[...], preferred_element_type=jnp.float32)
    gx = gx + b_ref[...]                     # bias folded in once, not per step
    gx_ref[...] = gx.reshape(tc, bp, gx.shape[-1]).astype(gx_ref.dtype)


def _input_projection(x_pad, wih_t, bias, tc):
    t_total, bp, i_dim = x_pad.shape
    h4 = wih_t.shape[1]
    return pl.pallas_call(
        _input_proj_kernel,
        out_shape=jax.ShapeDtypeStruct((t_total, bp, h4), jnp.float32),
        grid=(t_total // tc,),
        in_specs=[
            pl.BlockSpec((tc, bp, i_dim), lambda t: (t, 0, 0)),
            pl.BlockSpec((i_dim, h4), lambda t: (0, 0)),
            pl.BlockSpec((1, h4), lambda t: (0, 0)),
        ],
        out_specs=pl.BlockSpec((tc, bp, h4), lambda t: (t, 0, 0)),
        compiler_params=pltpu.CompilerParams(
            dimension_semantics=("parallel",)),
    )(x_pad, wih_t, bias)


# -----------------------------------------------------------------------------
# Kernel 2: recurrence with the weight-drop fused in.  Grid over time chunks,
# h/c state and the dropped recurrent weight live in VMEM scratch that
# persists across the (sequential) grid iterations.
# -----------------------------------------------------------------------------
def _lstm_rec_kernel(gx_ref, whh_t_ref, mask_ref, h_seq_ref, hn_ref, cn_ref,
                     h_state, c_state, whh_eff, *, hidden, scale, chunk):
    t = pl.program_id(0)

    @pl.when(t == 0)
    def _():
        h_state[...] = jnp.zeros_like(h_state)
        c_state[...] = jnp.zeros_like(c_state)
        # WeightDrop fused here: keep-mask + inverted-dropout scale applied
        # once to the pre-transposed recurrent weight; the result stays
        # resident in VMEM for the whole sequence.
        whh_eff[...] = (whh_t_ref[...].astype(jnp.float32)
                        * mask_ref[...].astype(jnp.float32)) * scale

    hd = hidden
    whh = whh_eff[...]
    h = h_state[...]
    c = c_state[...]

    # Inner time loop over the chunk; `chunk` is small and static so this is a
    # fully-unrolled loop (equivalent to lax.fori_loop(..., unroll=True)) and
    # removes the per-timestep grid/DMA overhead.
    for s in range(chunk):
        gates = gx_ref[s] + jnp.dot(h, whh, preferred_element_type=jnp.float32)
        # PyTorch gate order i | f | g | o.
        # TODO(synk): for H not a multiple of 128 these lane slices cause
        # relayouts; a lane-padded [*, 4, Hpad] gate layout would avoid them
        # at production sizes.
        i_g = jax.nn.sigmoid(gates[:, 0 * hd:1 * hd])
        f_g = jax.nn.sigmoid(gates[:, 1 * hd:2 * hd])
        g_g = jnp.tanh(gates[:, 2 * hd:3 * hd])
        o_g = jax.nn.sigmoid(gates[:, 3 * hd:4 * hd])
        c = f_g * c + i_g * g_g
        h = o_g * jnp.tanh(c)
        h_seq_ref[s] = h.astype(h_seq_ref.dtype)

    h_state[...] = h
    c_state[...] = c

    # h_n / c_n are revisited output blocks: write them only once, at the end.
    @pl.when(t == pl.num_programs(0) - 1)
    def _():
        hn_ref[...] = h.astype(hn_ref.dtype)
        cn_ref[...] = c.astype(cn_ref.dtype)


def _lstm_recurrence(gates_x, whh_t, mask_t, *, scale, hidden, tc, out_dtype):
    t_total, bp, h4 = gates_x.shape
    hd = hidden
    kernel = functools.partial(_lstm_rec_kernel, hidden=hd,
                               scale=float(scale), chunk=tc)
    out_shapes = (
        jax.ShapeDtypeStruct((t_total, bp, hd), out_dtype),  # output sequence
        jax.ShapeDtypeStruct((bp, hd), out_dtype),           # h_n
        jax.ShapeDtypeStruct((bp, hd), out_dtype),           # c_n
    )
    return pl.pallas_call(
        kernel,
        out_shape=out_shapes,
        grid=(t_total // tc,),
        in_specs=[
            pl.BlockSpec((tc, bp, h4), lambda t: (t, 0, 0)),
            pl.BlockSpec((hd, h4), lambda t: (0, 0)),
            pl.BlockSpec(mask_t.shape, lambda t: (0, 0)),
        ],
        out_specs=[
            pl.BlockSpec((tc, bp, hd), lambda t: (t, 0, 0)),
            pl.BlockSpec((bp, hd), lambda t: (0, 0)),
            pl.BlockSpec((bp, hd), lambda t: (0, 0)),
        ],
        scratch_shapes=[
            pltpu.VMEM((bp, hd), jnp.float32),   # h state (persists over grid)
            pltpu.VMEM((bp, hd), jnp.float32),   # c state
            pltpu.VMEM((hd, h4), jnp.float32),   # dropped transposed W_hh
        ],
        compiler_params=pltpu.CompilerParams(
            dimension_semantics=("arbitrary",)),   # recurrence over time
    )(gates_x, whh_t, mask_t)


# -----------------------------------------------------------------------------
# WeightDrop mask + forward wrapper
# -----------------------------------------------------------------------------
def _make_whh_mask(key, h4, hd, *, p, variational, training):
    """Keep-mask (in the transposed [H, 4H] layout) and inverted-dropout scale.

    Effective dropped, transposed recurrent weight = whh_t_raw * mask_t * scale,
    matching F.dropout / the variational row-mask of WeightDrop._setweights().
    """
    p = float(p)
    if (not training) or p == 0.0:
        return jnp.ones((1, h4), jnp.float32), 1.0
    if p >= 1.0:
        # torch drops everything at p == 1; guard the 1/(1-p) inf.
        return jnp.zeros((1, h4), jnp.float32), 0.0
    scale = 1.0 / (1.0 - p)
    if variational:
        # one mask value per ROW of the raw [4H, H] weight
        # == per COLUMN of the transposed [H, 4H] weight, broadcast over rows.
        keep = (jax.random.uniform(key, (h4,)) >= p).astype(jnp.float32)
        return keep.reshape(1, h4), scale
    keep = (jax.random.uniform(key, (h4, hd)) >= p).astype(jnp.float32)
    return jnp.transpose(keep), scale


def weight_drop_lstm_forward(x, w_ih, w_hh_raw, b_ih, b_hh, *,
                             dropout, variational, training, dropout_key):
    """WeightDrop(nn.LSTM(I,H), ['weight_hh_l0'], dropout, variational).forward(x).

    Returns (output [T, B, H], (h_n [B, H], c_n [B, H])).
    """
    t_total, b, _ = x.shape
    h4, hd = w_hh_raw.shape
    assert h4 == 4 * hd

    # One-time layout glue: weights pre-transposed so every in-kernel matmul
    # is a plain row-major MXU dot; biases folded together once.
    wih_t = jnp.transpose(w_ih)                              # [I, 4H]
    whh_t = jnp.transpose(w_hh_raw)                          # [H, 4H]
    bias = (b_ih + b_hh).reshape(1, h4).astype(jnp.float32)  # [1, 4H]

    mask_t, scale = _make_whh_mask(dropout_key, h4, hd, p=dropout,
                                   variational=variational, training=training)

    # Pad the batch to a multiple of 8 sublanes (padded rows sliced off below).
    bp = max(8, _round_up(b, 8))
    if bp != b:
        x = jnp.pad(x, ((0, 0), (0, bp - b), (0, 0)))

    tc = _pick_time_chunk(t_total)

    gates_x = _input_projection(x, wih_t, bias, tc)          # [T, Bp, 4H] f32
    h_seq, h_n, c_n = _lstm_recurrence(
        gates_x, whh_t, mask_t, scale=scale, hidden=hd, tc=tc,
        out_dtype=x.dtype)

    return h_seq[:, :b, :], (h_n[:b], c_n[:b])


# -----------------------------------------------------------------------------
# Pure-JAX reference LSTM (correctness check only)
# -----------------------------------------------------------------------------
def lstm_ref(x, w_ih, w_hh, b_ih, b_hh):
    _, b, _ = x.shape
    hd = w_hh.shape[1]
    hi = jax.lax.Precision.HIGHEST

    def step(carry, x_t):
        h, c = carry
        gates = (jnp.dot(x_t, w_ih.T, precision=hi)
                 + jnp.dot(h, w_hh.T, precision=hi) + b_ih + b_hh)
        i, f, g, o = jnp.split(gates, 4, axis=-1)
        c = jax.nn.sigmoid(f) * c + jax.nn.sigmoid(i) * jnp.tanh(g)
        h = jax.nn.sigmoid(o) * jnp.tanh(c)
        return (h, c), h

    init = (jnp.zeros((b, hd), jnp.float32), jnp.zeros((b, hd), jnp.float32))
    (h_n, c_n), hs = jax.lax.scan(step, init, x)
    return hs, h_n, c_n


if __name__ == "__main__":
    # Shapes implied by WeightDrop(nn.LSTM(I, H), ['weight_hh_l0'], dropout=0.5)
    T, B, I, H = 8, 2, 32, 32
    dropout = 0.5

    key = jax.random.PRNGKey(0)
    k_x, k_ih, k_hh, k_bih, k_bhh, k_drop, k_drop_v = jax.random.split(key, 7)
    bound = 1.0 / (H ** 0.5)      # PyTorch LSTM init: U(-1/sqrt(H), 1/sqrt(H))
    x = jax.random.normal(k_x, (T, B, I), jnp.float32)
    w_ih = jax.random.uniform(k_ih, (4 * H, I), jnp.float32, -bound, bound)
    w_hh_raw = jax.random.uniform(k_hh, (4 * H, H), jnp.float32, -bound, bound)
    b_ih = jax.random.uniform(k_bih, (4 * H,), jnp.float32, -bound, bound)
    b_hh = jax.random.uniform(k_bhh, (4 * H,), jnp.float32, -bound, bound)

    def run(variational, training, drop_key):
        return weight_drop_lstm_forward(
            x, w_ih, w_hh_raw, b_ih, b_hh, dropout=dropout,
            variational=variational, training=training, dropout_key=drop_key)

    def ref(variational, training, drop_key):
        mask_t, scale = _make_whh_mask(drop_key, 4 * H, H, p=dropout,
                                       variational=variational,
                                       training=training)
        w_hh = jnp.transpose(jnp.transpose(w_hh_raw) * mask_t * scale)
        return lstm_ref(x, w_ih, w_hh, b_ih, b_hh), w_hh

    # tolerance covers MXU f32-pass differences between Pallas dot and XLA ref
    tol = dict(atol=5e-3, rtol=5e-3)

    # 1) training mode, elementwise weight dropout (F.dropout on weight_hh_l0)
    out, (h_n, c_n) = run(False, True, k_drop)
    jax.block_until_ready((out, h_n, c_n))
    assert out.shape == (T, B, H) and h_n.shape == (B, H) and c_n.shape == (B, H)
    (r_out, r_hn, r_cn), w_hh_dropped = ref(False, True, k_drop)
    ratio = jnp.where(w_hh_raw != 0, w_hh_dropped / w_hh_raw, 0.0)
    assert bool(jnp.all((jnp.abs(ratio) < 1e-6)
                        | (jnp.abs(ratio - 1.0 / (1.0 - dropout)) < 1e-5)))
    assert 0.0 < float(jnp.mean(ratio == 0.0)) < 1.0   # some, not all, dropped
    assert jnp.allclose(out, r_out, **tol), "LSTM output mismatch (training)"
    assert jnp.allclose(h_n, r_hn, **tol), "h_n mismatch (training)"
    assert jnp.allclose(c_n, r_cn, **tol), "c_n mismatch (training)"

    # 2) variational (per-row) weight dropout
    out_v, (hn_v, cn_v) = run(True, True, k_drop_v)
    jax.block_until_ready((out_v, hn_v, cn_v))
    (rv_out, rv_hn, rv_cn), _ = ref(True, True, k_drop_v)
    assert jnp.allclose(out_v, rv_out, **tol), "output mismatch (variational)"
    assert jnp.allclose(hn_v, rv_hn, **tol), "h_n mismatch (variational)"
    assert jnp.allclose(cn_v, rv_cn, **tol), "c_n mismatch (variational)"

    # 3) eval mode: dropout disabled, plain LSTM on the raw weight
    out_e, (hn_e, cn_e) = run(False, False, k_drop)
    jax.block_until_ready((out_e, hn_e, cn_e))
    re_out, re_hn, re_cn = lstm_ref(x, w_ih, w_hh_raw, b_ih, b_hh)
    assert jnp.allclose(out_e, re_out, **tol), "output mismatch (eval)"
    assert jnp.allclose(hn_e, re_hn, **tol), "h_n mismatch (eval)"
    assert jnp.allclose(cn_e, re_cn, **tol), "c_n mismatch (eval)"

    print("KERNEL_OK")
</pallas_src>

<mosaic_0001>
module attributes {stable_mosaic.version = 11 : i64} {
  func.func @_input_proj_kernel(%arg0: i32, %arg1: memref<8x8x32xf32, #tpu.memory_space<vmem>>, %arg2: memref<32x128xf32, #tpu.memory_space<vmem>>, %arg3: memref<1x128xf32, #tpu.memory_space<vmem>>, %arg4: memref<8x8x128xf32, #tpu.memory_space<vmem>>) attributes {dimension_semantics = [#tpu.dimension_semantics<parallel>], iteration_bounds = array<i64: 1>, scalar_prefetch = 0 : i64, scratch_operands = 0 : i64, tpu.core_type = #tpu.core_type<tc>, window_params = [{transform_indices = @transform_0, window_bounds = array<i64: 8, 8, 32>}, {pipeline_mode = #tpu.pipeline_mode<synchronous>, transform_indices = @transform_1, window_bounds = array<i64: 32, 128>}, {pipeline_mode = #tpu.pipeline_mode<synchronous>, transform_indices = @transform_2, window_bounds = array<i64: 1, 128>}, {transform_indices = @transform_3, window_bounds = array<i64: 8, 8, 128>}]} {
    %c0 = arith.constant 0 : index
    %c0_0 = arith.constant 0 : index
    %c0_1 = arith.constant 0 : index
    %0 = vector.load %arg1[%c0, %c0_0, %c0_1] : memref<8x8x32xf32, #tpu.memory_space<vmem>>, vector<8x8x32xf32>
    %1 = vector.shape_cast %0 : vector<8x8x32xf32> to vector<64x32xf32>
    %c0_2 = arith.constant 0 : index
    %c0_3 = arith.constant 0 : index
    %2 = vector.load %arg2[%c0_2, %c0_3] : memref<32x128xf32, #tpu.memory_space<vmem>>, vector<32x128xf32>
    %cst = arith.constant dense<0.000000e+00> : vector<64x128xf32>
    %3 = tpu.matmul %1, %2, %cst {dimension_numbers = #tpu.dot_dimension_numbers<[1], [0], [0], [1], [0, 0, 1, 1], [], []>} : vector<64x32xf32>, vector<32x128xf32>, vector<64x128xf32> -> vector<64x128xf32>
    %c0_4 = arith.constant 0 : index
    %c0_5 = arith.constant 0 : index
    %4 = vector.load %arg3[%c0_4, %c0_5] : memref<1x128xf32, #tpu.memory_space<vmem>>, vector<1x128xf32>
    %5 = vector.broadcast %4 : vector<1x128xf32> to vector<64x128xf32>
    %6 = arith.addf %3, %5 : vector<64x128xf32>
    %7 = vector.shape_cast %6 : vector<64x128xf32> to vector<8x8x128xf32>
    %c0_6 = arith.constant 0 : index
    %c0_7 = arith.constant 0 : index
    %c0_8 = arith.constant 0 : index
    %8 = vector.load %arg4[%c0_6, %c0_7, %c0_8] : memref<8x8x128xf32, #tpu.memory_space<vmem>>, vector<8x8x128xf32>
    tpu.vector_store %arg4[%c0_6, %c0_7, %c0_8], %7 {strides = array<i32>} : memref<8x8x128xf32, #tpu.memory_space<vmem>>, vector<8x8x128xf32>,
    return
  }
  func.func @transform_0(%arg0: i32) -> (i32, i32, i32) {
    %c0_i32 = arith.constant 0 : i32
    %c0_i32_0 = arith.constant 0 : i32
    %c0_i32_1 = arith.constant 0 : i32
    return %arg0, %c0_i32, %c0_i32_0 : i32, i32, i32
  }
  func.func @transform_1(%arg0: i32) -> (i32, i32) {
    %c0_i32 = arith.constant 0 : i32
    %c0_i32_0 = arith.constant 0 : i32
    %c0_i32_1 = arith.constant 0 : i32
    return %c0_i32, %c0_i32_0 : i32, i32
  }
  func.func @transform_2(%arg0: i32) -> (i32, i32) {
    %c0_i32 = arith.constant 0 : i32
    %c0_i32_0 = arith.constant 0 : i32
    %c0_i32_1 = arith.constant 0 : i32
    return %c0_i32, %c0_i32_0 : i32, i32
  }
  func.func @transform_3(%arg0: i32) -> (i32, i32, i32) {
    %c0_i32 = arith.constant 0 : i32
    %c0_i32_0 = arith.constant 0 : i32
    %c0_i32_1 = arith.constant 0 : i32
    return %arg0, %c0_i32, %c0_i32_0 : i32, i32, i32
  }
}

</mosaic_0001>

<llo_original>
// kernel: tpu_custom_call.1
$region0: #{tpu_custom_call.1}
  #allocation0 [shape = 'u32[]', space=smem, size = 0x4, offset = 0x4, fixed_abs, tag = 'smem constant byte address 0x4 - core index']
  #allocation1 [shape = 'u32[144,128]{1,0:T(1,128)}', space=vmem, size = 0x12000, scoped, tag = 'internal scratch']
  %s0 = inlined_call_operand.hbm [shape: f32[8,8,32], index: 0, kind: input, shape index: {}]
  %s1 = inlined_call_operand.hbm [shape: f32[32,128], index: 1, kind: input, shape index: {}]
  %s2 = inlined_call_operand.vmem [shape: f32[1,128], index: 2, kind: input, shape index: {}]
  %s3 = inlined_call_operand.hbm [shape: f32[8,8,128], index: 3, kind: output, shape index: {}]
  %s4 = sld [smem:[#allocation0]]
  $region30: #{tpu_custom_call.1} parent=0
    _
  %s6 = ssub.s32 1, %s4
  %s7 = scalar_select 0, %s6, %s4
  $region1: #{tpu_custom_call.1} parent=0
    #allocation2 [shape = 'u8[32768]{0}', space=vmem, size = 0x8000, scoped, tag = 'input window, operand 0, single buffered']
    #allocation3 [shape = 's32[1]{0}', space=sflag, size = 0x4, scoped, tag = 'scoped memory for tpu_custom_call.1']
    #allocation4 [shape = 's32[1]{0}', space=sflag, size = 0x4, scoped, tag = 'scoped memory for tpu_custom_call.1']
    #allocation5 [shape = 'u8[16384]{0}', space=vmem, size = 0x4000, scoped, tag = 'input window, operand 1, single buffered']
    #allocation6 [shape = 's32[1]{0}', space=sflag, size = 0x4, scoped, tag = 'scoped memory for tpu_custom_call.1']
    #allocation7 [shape = 'u8[32768]{0}', space=vmem, size = 0x8000, scoped, tag = 'output window, operand 0, single buffered']
    %8 = vsyncpa [#allocation3], 0
    %9 = vsyncpa [#allocation6], 0
    %10 = vsyncpa [#allocation4], 0
    // Predicated region
    $region2: #{tpu_custom_call.1} parent=1 // pred_check
      _
    $region3: #{tpu_custom_call.1} parent=1 // pred_check_branch
      %12 = sbr.rel (0) target = $region5
    $region4: #{tpu_custom_call.1} parent=1 // pred_region
      %s14 = ssub.s32 1024, 1024
      %15 = vsyncadd [#allocation3], %s14
      %s16 = sshll.u32 [#allocation2], 4
      %s17 = int_to_ptr.vmem [resolvable:$true] %s16
      %22 = dma.hbm_to_vmem [thread:$0]  %s0, 1024, %s17, [#allocation3], 128, 128, 8
    $region5: #{tpu_custom_call.1} parent=1 // pred_fallthru
      _
    // Predicated region
    $region6: #{tpu_custom_call.1} parent=1 // pred_check
      _
    $region7: #{tpu_custom_call.1} parent=1 // pred_check_branch
      %24 = sbr.rel (0) target = $region9
    $region8: #{tpu_custom_call.1} parent=1 // pred_region
      %s26 = ssub.s32 512, 512
      %27 = vsyncadd [#allocation6], %s26
      %s28 = sshll.u32 [#allocation5], 4
      %s29 = int_to_ptr.vmem [resolvable:$true] %s28
      %34 = dma.hbm_to_vmem [thread:$0]  %s1, 512, %s29, [#allocation6], 128, 128, 8
    $region9: #{tpu_custom_call.1} parent=1 // pred_fallthru
      _
    // Predicated region
    $region10: #{tpu_custom_call.1} parent=1 // pred_check
      _
    $region11: #{tpu_custom_call.1} parent=1 // pred_check_branch
      %36 = sbr.rel (0) target = $region13
    $region12: #{tpu_custom_call.1} parent=1 // pred_region
      _
    $region13: #{tpu_custom_call.1} parent=1 // pred_fallthru
      _
    // Predicated region
    $region14: #{tpu_custom_call.1} parent=1 // pred_check
      _
    $region15: #{tpu_custom_call.1} parent=1 // pred_check_branch
      %38 = sbr.rel (0) target = $region17
    $region16: #{tpu_custom_call.1} parent=1 // pred_region
      %39 = dma.done [#allocation3], 1024
    $region17: #{tpu_custom_call.1} parent=1 // pred_fallthru
      _
    // Predicated region
    $region18: #{tpu_custom_call.1} parent=1 // pred_check
      _
    $region19: #{tpu_custom_call.1} parent=1 // pred_check_branch
      %41 = sbr.rel (0) target = $region21
    $region20: #{tpu_custom_call.1} parent=1 // pred_region
      %42 = dma.done [#allocation6], 512
    $region21: #{tpu_custom_call.1} parent=1 // pred_fallthru
      _
    %v43 = vld [vmem:[#allocation2] sm:$0xff]
    %v44 = vld [vmem:[#allocation2 + $0x8] sm:$0xff]
    %v45 = vld [vmem:[#allocation2 + $0x10] sm:$0xff]
    %v46 = vld [vmem:[#allocation2 + $0x18] sm:$0xff]
    %v47 = vld [vmem:[#allocation2 + $0x20] sm:$0xff]
    %v48 = vld [vmem:[#allocation2 + $0x28] sm:$0xff]
    %v49 = vld [vmem:[#allocation2 + $0x30] sm:$0xff]
    %v50 = vld [vmem:[#allocation2 + $0x38] sm:$0xff]
    %v51 = vld [vmem:[#allocation5] sm:$0xff]
    %v52 = vld [vmem:[#allocation5 + $0x8] sm:$0xff]
    %v53 = vld [vmem:[#allocation5 + $0x10] sm:$0xff]
    %v54 = vld [vmem:[#allocation5 + $0x18] sm:$0xff]
    %v55 = vld [vmem:[%s2] sm:$0x1]
    %v57 = vlaneseq
    %v58 = vshrl.u32 %v57, 7
    %v59 = vsub.s32 0, %v58
    %v60 = vrot.slane %v55, %v59
    %vm62 = vcmask 261120
    %v64 = vsel %vm62, %v43, 0
    %v67 = vsel %vm62, %v44, 0
    %v70 = vsel %vm62, %v45, 0
    %v73 = vsel %vm62, %v46, 0
    %v76 = vsel %vm62, %v47, 0
    %v79 = vsel %vm62, %v48, 0
    %v82 = vsel %vm62, %v49, 0
    %v85 = vsel %vm62, %v50, 0
    %87 = vmatprep.subr.mxu0 0.0
    %88 = vmatpush1.msra.mxu0 %v51
    %89 = vmatprep.subr.mxu0 0.0
    %90 = vmatpush1.msra.mxu0 %v52
    %91 = vmatprep.subr.mxu0 0.0
    %92 = vmatpush1.msra.mxu0 %v53
    %93 = vmatprep.subr.mxu0 0.0
    %94 = vmatpush1.msra.mxu0 %v54
    %95 = vmatprep.subr.mxu0 0.0
    %96 = vmatpush1.msra.mxu0 0.0
    %97 = vmatprep.subr.mxu0 0.0
    %98 = vmatpush1.msra.mxu0 0.0
    %99 = vmatprep.subr.mxu0 0.0
    %100 = vmatpush1.msra.mxu0 0.0
    %101 = vmatprep.subr.mxu0 0.0
    %102 = vmatpush1.msra.mxu0 0.0
    %103 = vmatprep.subr.mxu0 0.0
    %104 = vmatpush1.msra.mxu0 0.0
    %105 = vmatprep.subr.mxu0 0.0
    %106 = vmatpush1.msra.mxu0 0.0
    %107 = vmatprep.subr.mxu0 0.0
    %108 = vmatpush1.msra.mxu0 0.0
    %109 = vmatprep.subr.mxu0 0.0
    %110 = vmatpush1.msra.mxu0 0.0
    %111 = vmatprep.subr.mxu0 0.0
    %112 = vmatpush1.msra.mxu0 0.0
    %113 = vmatprep.subr.mxu0 0.0
    %114 = vmatpush1.msra.mxu0 0.0
    %115 = vmatprep.subr.mxu0 0.0
    %116 = vmatpush1.msra.mxu0 0.0
    %117 = vmatprep.subr.mxu0 0.0
    %118 = vmatpush1.msra.mxu0 0.0
    %119 = vmatprep.subr.mxu0 0.0
    %120 = vmatpush1.msra.mxu0 0.0
    %121 = vmatprep.subr.mxu0 0.0
    %122 = vmatpush1.msra.mxu0 0.0
    %123 = vmatprep.subr.mxu0 0.0
    %124 = vmatpush1.msra.mxu0 0.0
    %125 = vmatprep.subr.mxu0 0.0
    %126 = vmatpush1.msra.mxu0 0.0
    %127 = vmatprep.subr.mxu0 0.0
    %128 = vmatpush1.msra.mxu0 0.0
    %129 = vmatprep.subr.mxu0 0.0
    %130 = vmatpush1.msra.mxu0 0.0
    %131 = vmatprep.subr.mxu0 0.0
    %132 = vmatpush1.msra.mxu0 0.0
    %133 = vmatprep.subr.mxu0 0.0
    %134 = vmatpush1.msra.mxu0 0.0
    %135 = vmatprep.subr.mxu0 0.0
    %136 = vmatpush1.msra.mxu0 0.0
    %137 = vmatprep.subr.mxu0 0.0
    %138 = vmatpush1.msra.mxu0 0.0
    %139 = vmatprep.subr.mxu0 0.0
    %140 = vmatpush1.msra.mxu0 0.0
    %141 = vmatprep.subr.mxu0 0.0
    %142 = vmatpush1.msra.mxu0 0.0
    %143 = vmatprep.subr.mxu0 0.0
    %144 = vmatpush1.msra.mxu0 0.0
    %145 = vmatprep.subr.mxu0 0.0
    %146 = vmatpush1.msra.mxu0 0.0
    %147 = vmatprep.subr.mxu0 0.0
    %148 = vmatpush1.msra.mxu0 0.0
    %149 = vmatprep.subr.mxu0 0.0
    %150 = vmatpush1.msra.mxu0 0.0
    %151 = vmatprep.mubr.f32.mxu0 0.0
    %152 = vmatmul.mubr.f32.gmra.mrb[0].mxu0 %v64
    %v153 = vpop.f32.mrb[0].mxu0
    %v154 = vadd.f32 %v60, %v153
    %v155 = vpop.f32.mrb[0].mxu0
    %156 = vmatprep.mubr.f32.mxu0 0.0
    %157 = vmatmul.mubr.f32.gmra.mrb[0].mxu0 %v67
    %v158 = vpop.f32.mrb[0].mxu0
    %v159 = vadd.f32 %v60, %v158
    %v160 = vpop.f32.mrb[0].mxu0
    %161 = vmatprep.mubr.f32.mxu0 0.0
    %162 = vmatmul.mubr.f32.gmra.mrb[0].mxu0 %v70
    %v163 = vpop.f32.mrb[0].mxu0
    %v164 = vadd.f32 %v60, %v163
    %v165 = vpop.f32.mrb[0].mxu0
    %166 = vmatprep.mubr.f32.mxu0 0.0
    %167 = vmatmul.mubr.f32.gmra.mrb[0].mxu0 %v73
    %v168 = vpop.f32.mrb[0].mxu0
    %v169 = vadd.f32 %v60, %v168
    %v170 = vpop.f32.mrb[0].mxu0
    %171 = vmatprep.mubr.f32.mxu0 0.0
    %172 = vmatmul.mubr.f32.gmra.mrb[0].mxu0 %v76
    %v173 = vpop.f32.mrb[0].mxu0
    %v174 = vadd.f32 %v60, %v173
    %v175 = vpop.f32.mrb[0].mxu0
    %176 = vmatprep.mubr.f32.mxu0 0.0
    %177 = vmatmul.mubr.f32.gmra.mrb[0].mxu0 %v79
    %v178 = vpop.f32.mrb[0].mxu0
    %v179 = vadd.f32 %v60, %v178
    %v180 = vpop.f32.mrb[0].mxu0
    %181 = vmatprep.mubr.f32.mxu0 0.0
    %182 = vmatmul.mubr.f32.gmra.mrb[0].mxu0 %v82
    %v183 = vpop.f32.mrb[0].mxu0
    %v184 = vadd.f32 %v60, %v183
    %v185 = vpop.f32.mrb[0].mxu0
    %186 = vmatprep.mubr.f32.mxu0 0.0
    %187 = vmatmul.mubr.f32.gmra.mrb[0].mxu0 %v85
    %v188 = vpop.f32.mrb[0].mxu0
    %v189 = vadd.f32 %v60, %v188
    %v190 = vpop.f32.mrb[0].mxu0
    %191 = vdwg.mxu0
    %192 = vst [vmem:[#allocation7] sm:$0xff] %v154
    %193 = vst [vmem:[#allocation7 + $0x8] sm:$0xff] %v159
    %194 = vst [vmem:[#allocation7 + $0x10] sm:$0xff] %v164
    %195 = vst [vmem:[#allocation7 + $0x18] sm:$0xff] %v169
    %196 = vst [vmem:[#allocation7 + $0x20] sm:$0xff] %v174
    %197 = vst [vmem:[#allocation7 + $0x28] sm:$0xff] %v179
    %198 = vst [vmem:[#allocation7 + $0x30] sm:$0xff] %v184
    %199 = vst [vmem:[#allocation7 + $0x38] sm:$0xff] %v189
    // Predicated region
    $region22: #{tpu_custom_call.1} parent=1 // pred_check
      _
    $region23: #{tpu_custom_call.1} parent=1 // pred_check_branch
      %201 = sbr.rel (0) target = $region25
    $region24: #{tpu_custom_call.1} parent=1 // pred_region
      %s203 = ssub.s32 1024, 1024
      %204 = vsyncadd [#allocation4], %s203
      %s205 = sshll.u32 [#allocation7], 4
      %s206 = int_to_ptr.vmem [resolvable:$true] %s205
      %211 = dma.vmem_to_hbm [thread:$0]  %s206, 1024, %s3, [#allocation4], 128, 128, 8
    $region25: #{tpu_custom_call.1} parent=1 // pred_fallthru
      _
    // Predicated region
    $region26: #{tpu_custom_call.1} parent=1 // pred_check
      _
    $region27: #{tpu_custom_call.1} parent=1 // pred_check_branch
      %213 = sbr.rel (0) target = $region29
    $region28: #{tpu_custom_call.1} parent=1 // pred_region
      %214 = dma.done [#allocation4], 1024
    $region29: #{tpu_custom_call.1} parent=1 // pred_fallthru
      _
    %215 = vsyncpa [#allocation3], 1
    %216 = vsyncpa [#allocation6], 1
    %217 = vsyncpa [#allocation4], 1

</llo_original>
